<compile_context>
chip_gen: v7x
topology: tpu7x:2x2x1
jax: 0.10.0
libtpu: 0.0.40
codegen_flags: <defaults>
</compile_context>

<pallas_src>
import functools

import jax
import jax.numpy as jnp
from jax import lax
from jax.experimental import pallas as pl
from jax.experimental.pallas import tpu as pltpu


def _attention_kernel(kq_ref, v_ref, wcat_ref, w0t_ref, bias_ref, o_ref,
                      *, mxu_dtype=None):
    TB, S, H2 = kq_ref.shape
    H = H2 // 2
    L = w0t_ref.shape[1]
    M = TB * S

    def mx(x):
        # Optional cast for the weight-contraction matmuls only (v6e/v7x
        # headroom at scale).  Softmax math and p@v always stay f32.
        return x if mxu_dtype is None else x.astype(mxu_dtype)

    # Fold (TB, S) -> M (leading-dim merge, no lane movement) and run the
    # fused first-stage matmul:  k@W1 + q@W2 + b == [k|q] @ [[W1],[W2]] + b.
    kq = kq_ref[...].reshape(M, 2 * H)                                   # (M, 2H)
    h = jnp.dot(mx(kq), mx(wcat_ref[...]),
                preferred_element_type=jnp.float32)                      # (M, H)
    h = jnp.maximum(h + bias_ref[...], 0.0)                              # f32 on VPU

    # Second stage: (M, H) @ (H, L)   (W0 pre-transposed in the wrapper).
    alpha = jnp.dot(mx(h), mx(w0t_ref[...]),
                    preferred_element_type=jnp.float32)                  # (M, L)
    alpha = alpha.reshape(TB, S, L)                                      # split lead dim

    # Batched softmax over the sequence axis (axis=1), all f32 (v5e-safe).
    m = jnp.max(alpha, axis=1, keepdims=True)                            # (TB, 1, L)
    e = jnp.exp(alpha - m)                                               # EUP
    z = jnp.sum(e, axis=1, keepdims=True)                                # (TB, 1, L)
    p = e * pl.reciprocal(z, approx=True)                                # EUP vrcp

    # out[b] = p[b]^T @ v[b]  — batched matmul contracting over S; p and v
    # stay f32 regardless of mxu_dtype (avoids avoidable softmax error).
    out = jnp.einsum('bsl,bsh->blh', p, v_ref[...].astype(jnp.float32),
                     preferred_element_type=jnp.float32)                 # (TB, L, H)

    o_ref[...] = out.astype(o_ref.dtype)


def _default_batch_tile(B):
    # v7x has 2 TensorCores per chip; keep >= 2 "parallel" grid steps there
    # so dimension_semantics can shard the batch across cores.  Elsewhere a
    # single grid step minimizes the ~0.35 us per-step overhead.
    try:
        kind = jax.devices()[0].device_kind.lower()
        if "v7" in kind and B >= 2 and B % 2 == 0:
            return B // 2
    except Exception:
        pass
    return B


def attention_pallas(q, k, v, w1, w2, w0, bias, *, batch_tile=None, mxu_dtype=None):
    B, S, H = q.shape
    L = w0.shape[0]
    if batch_tile is None:
        batch_tile = _default_batch_tile(B)
    assert B % batch_tile == 0, "batch_tile must divide B"
    nsteps = B // batch_tile

    # Wrapper-side layout plumbing (tiny XLA copies, not compute):
    kq = jnp.concatenate([k, q], axis=-1)        # (B, S, 2H): enables fused matmul
    wcat = jnp.concatenate([w1, w2], axis=0)     # (2H, H):  [k|q] @ wcat == k@W1 + q@W2
    w0t = jnp.transpose(w0)                      # (H, L)
    bias2d = bias.reshape(1, H)

    kernel = functools.partial(_attention_kernel, mxu_dtype=mxu_dtype)

    # Advisory cost estimate (latency-dominated kernel; helps XLA scheduling).
    flops = 2 * B * S * (2 * H) * H + 2 * B * S * H * L + 2 * B * L * S * H
    transcendentals = B * S * L + B * L
    bytes_accessed = 4 * (B * S * (2 * H) + B * S * H + 2 * H * H + H * L + H
                          + B * L * H)

    grid_spec = pltpu.PrefetchScalarGridSpec(
        num_scalar_prefetch=0,
        grid=(nsteps,),
        in_specs=[
            pl.BlockSpec((batch_tile, S, 2 * H), lambda i: (i, 0, 0)),   # [k|q]
            pl.BlockSpec((batch_tile, S, H), lambda i: (i, 0, 0)),       # v
            pl.BlockSpec((2 * H, H), lambda i: (0, 0)),                  # [W1; W2]
            pl.BlockSpec((H, L), lambda i: (0, 0)),                      # W0^T
            pl.BlockSpec((1, H), lambda i: (0, 0)),                      # bias
        ],
        out_specs=pl.BlockSpec((batch_tile, L, H), lambda i: (i, 0, 0)),
    )

    out = pl.pallas_call(
        kernel,
        out_shape=jax.ShapeDtypeStruct((B, L, H), q.dtype),
        grid_spec=grid_spec,
        compiler_params=pltpu.CompilerParams(
            dimension_semantics=("parallel",)),
        cost_estimate=pl.CostEstimate(
            flops=flops,
            transcendentals=transcendentals,
            bytes_accessed=bytes_accessed),
    )(kq, v, wcat, w0t, bias2d)

    return out


def attention_reference(q, k, v, w1, w2, w0, bias):
    h = jax.nn.relu(k @ w1 + q @ w2 + bias)
    alpha = h @ w0.T
    alpha = jax.nn.softmax(alpha, axis=-2)
    return jnp.swapaxes(alpha, -1, -2) @ v


if __name__ == "__main__":
    # Small shapes consistent with the module: hidden_dim=32, session_len=8.
    B, S, H = 2, 8, 32
    L = S

    key = jax.random.PRNGKey(0)
    kq_, kk_, kv_, k0, k1, k2 = jax.random.split(key, 6)

    q = jax.random.normal(kq_, (B, S, H), dtype=jnp.float32)
    k = jax.random.normal(kk_, (B, S, H), dtype=jnp.float32)
    v = jax.random.normal(kv_, (B, S, H), dtype=jnp.float32)

    # Deterministic parameter init matching nn.init.normal_(.., 0, 0.05) / zeros.
    w0 = 0.05 * jax.random.normal(k0, (L, H), dtype=jnp.float32)
    w1 = 0.05 * jax.random.normal(k1, (H, H), dtype=jnp.float32)
    w2 = 0.05 * jax.random.normal(k2, (H, H), dtype=jnp.float32)
    bias = jnp.zeros((H,), dtype=jnp.float32)

    out = attention_pallas(q, k, v, w1, w2, w0, bias)
    out = jax.block_until_ready(out)

    ref = attention_reference(q, k, v, w1, w2, w0, bias)
    assert out.shape == (B, L, H)
    # Tolerance covers the EUP approximate reciprocal in the softmax
    # denominator; matmuls accumulate in f32 and softmax math is f32.
    assert jnp.allclose(out, ref, atol=2e-3, rtol=2e-3), \
        float(jnp.max(jnp.abs(out - ref)))

    print("KERNEL_OK")
</pallas_src>

<mosaic_0001>
module attributes {stable_mosaic.version = 11 : i64} {
  func.func @_attention_kernel(%arg0: i32, %arg1: memref<2x8x64xf32, #tpu.memory_space<vmem>>, %arg2: memref<2x8x32xf32, #tpu.memory_space<vmem>>, %arg3: memref<64x32xf32, #tpu.memory_space<vmem>>, %arg4: memref<32x8xf32, #tpu.memory_space<vmem>>, %arg5: memref<1x32xf32, #tpu.memory_space<vmem>>, %arg6: memref<2x8x32xf32, #tpu.memory_space<vmem>>) attributes {dimension_semantics = [#tpu.dimension_semantics<parallel>], iteration_bounds = array<i64: 1>, scalar_prefetch = 0 : i64, scratch_operands = 0 : i64, tpu.core_type = #tpu.core_type<tc>, window_params = [{transform_indices = @transform_0, window_bounds = array<i64: 2, 8, 64>}, {transform_indices = @transform_1, window_bounds = array<i64: 2, 8, 32>}, {pipeline_mode = #tpu.pipeline_mode<synchronous>, transform_indices = @transform_2, window_bounds = array<i64: 64, 32>}, {pipeline_mode = #tpu.pipeline_mode<synchronous>, transform_indices = @transform_3, window_bounds = array<i64: 32, 8>}, {pipeline_mode = #tpu.pipeline_mode<synchronous>, transform_indices = @transform_4, window_bounds = array<i64: 1, 32>}, {transform_indices = @transform_5, window_bounds = array<i64: 2, 8, 32>}]} {
    %c0 = arith.constant 0 : index
    %c0_0 = arith.constant 0 : index
    %c0_1 = arith.constant 0 : index
    %0 = vector.load %arg1[%c0, %c0_0, %c0_1] : memref<2x8x64xf32, #tpu.memory_space<vmem>>, vector<2x8x64xf32>
    %1 = vector.shape_cast %0 : vector<2x8x64xf32> to vector<16x64xf32>
    %c0_2 = arith.constant 0 : index
    %c0_3 = arith.constant 0 : index
    %2 = vector.load %arg3[%c0_2, %c0_3] : memref<64x32xf32, #tpu.memory_space<vmem>>, vector<64x32xf32>
    %cst = arith.constant dense<0.000000e+00> : vector<16x32xf32>
    %3 = tpu.matmul %1, %2, %cst {dimension_numbers = #tpu.dot_dimension_numbers<[1], [0], [0], [1], [0, 0, 1, 1], [], []>} : vector<16x64xf32>, vector<64x32xf32>, vector<16x32xf32> -> vector<16x32xf32>
    %c0_4 = arith.constant 0 : index
    %c0_5 = arith.constant 0 : index
    %4 = vector.load %arg5[%c0_4, %c0_5] : memref<1x32xf32, #tpu.memory_space<vmem>>, vector<1x32xf32>
    %5 = vector.broadcast %4 : vector<1x32xf32> to vector<16x32xf32>
    %6 = arith.addf %3, %5 : vector<16x32xf32>
    %cst_6 = arith.constant 0.000000e+00 : f32
    %7 = vector.broadcast %cst_6 : f32 to vector<16x32xf32>
    %8 = arith.maximumf %6, %7 : vector<16x32xf32>
    %c0_7 = arith.constant 0 : index
    %c0_8 = arith.constant 0 : index
    %9 = vector.load %arg4[%c0_7, %c0_8] : memref<32x8xf32, #tpu.memory_space<vmem>>, vector<32x8xf32>
    %cst_9 = arith.constant dense<0.000000e+00> : vector<16x8xf32>
    %10 = tpu.matmul %8, %9, %cst_9 {dimension_numbers = #tpu.dot_dimension_numbers<[1], [0], [0], [1], [0, 0, 1, 1], [], []>} : vector<16x32xf32>, vector<32x8xf32>, vector<16x8xf32> -> vector<16x8xf32>
    %11 = vector.shape_cast %10 : vector<16x8xf32> to vector<2x8x8xf32>
    %cst_10 = arith.constant dense<0xFF800000> : vector<2x8xf32>
    %12 = vector.multi_reduction <maximumf>, %11, %cst_10 [1] : vector<2x8x8xf32> to vector<2x8xf32>
    %13 = vector.shape_cast %12 : vector<2x8xf32> to vector<2x1x8xf32>
    %14 = vector.broadcast %13 : vector<2x1x8xf32> to vector<2x8x8xf32>
    %15 = arith.subf %11, %14 : vector<2x8x8xf32>
    %16 = math.exp %15 : vector<2x8x8xf32>
    %cst_11 = arith.constant dense<0.000000e+00> : vector<2x8xf32>
    %17 = vector.multi_reduction <add>, %16, %cst_11 [1] : vector<2x8x8xf32> to vector<2x8xf32>
    %18 = vector.shape_cast %17 : vector<2x8xf32> to vector<2x1x8xf32>
    %19 = tpu.reciprocal %18 {approx = true} : vector<2x1x8xf32> -> vector<2x1x8xf32>
    %20 = vector.broadcast %19 : vector<2x1x8xf32> to vector<2x8x8xf32>
    %21 = arith.mulf %16, %20 : vector<2x8x8xf32>
    %c0_12 = arith.constant 0 : index
    %c0_13 = arith.constant 0 : index
    %c0_14 = arith.constant 0 : index
    %22 = vector.load %arg2[%c0_12, %c0_13, %c0_14] : memref<2x8x32xf32, #tpu.memory_space<vmem>>, vector<2x8x32xf32>
    "tpu.trace_start"() <{level = 10 : i32, message = "bsl,bsh->blh"}> : () -> ()
    %cst_15 = arith.constant dense<0.000000e+00> : vector<2x8x32xf32>
    %23 = tpu.matmul %21, %22, %cst_15 {dimension_numbers = #tpu.dot_dimension_numbers<[1], [1], [2], [2], [0, 0, 0, 2, 1, 2], [0], [0]>} : vector<2x8x8xf32>, vector<2x8x32xf32>, vector<2x8x32xf32> -> vector<2x8x32xf32>
    "tpu.trace_stop"() : () -> ()
    %c0_16 = arith.constant 0 : index
    %c0_17 = arith.constant 0 : index
    %c0_18 = arith.constant 0 : index
    %24 = vector.load %arg6[%c0_16, %c0_17, %c0_18] : memref<2x8x32xf32, #tpu.memory_space<vmem>>, vector<2x8x32xf32>
    tpu.vector_store %arg6[%c0_16, %c0_17, %c0_18], %23 {strides = array<i32>} : memref<2x8x32xf32, #tpu.memory_space<vmem>>, vector<2x8x32xf32>,
    return
  }
  func.func @transform_0(%arg0: i32) -> (i32, i32, i32) {
    %c0_i32 = arith.constant 0 : i32
    %c0_i32_0 = arith.constant 0 : i32
    %c0_i32_1 = arith.constant 0 : i32
    return %arg0, %c0_i32, %c0_i32_0 : i32, i32, i32
  }
  func.func @transform_1(%arg0: i32) -> (i32, i32, i32) {
    %c0_i32 = arith.constant 0 : i32
    %c0_i32_0 = arith.constant 0 : i32
    %c0_i32_1 = arith.constant 0 : i32
    return %arg0, %c0_i32, %c0_i32_0 : i32, i32, i32
  }
  func.func @transform_2(%arg0: i32) -> (i32, i32) {
    %c0_i32 = arith.constant 0 : i32
    %c0_i32_0 = arith.constant 0 : i32
    %c0_i32_1 = arith.constant 0 : i32
    return %c0_i32, %c0_i32_0 : i32, i32
  }
  func.func @transform_3(%arg0: i32) -> (i32, i32) {
    %c0_i32 = arith.constant 0 : i32
    %c0_i32_0 = arith.constant 0 : i32
    %c0_i32_1 = arith.constant 0 : i32
    return %c0_i32, %c0_i32_0 : i32, i32
  }
  func.func @transform_4(%arg0: i32) -> (i32, i32) {
    %c0_i32 = arith.constant 0 : i32
    %c0_i32_0 = arith.constant 0 : i32
    %c0_i32_1 = arith.constant 0 : i32
    return %c0_i32, %c0_i32_0 : i32, i32
  }
  func.func @transform_5(%arg0: i32) -> (i32, i32, i32) {
    %c0_i32 = arith.constant 0 : i32
    %c0_i32_0 = arith.constant 0 : i32
    %c0_i32_1 = arith.constant 0 : i32
    return %arg0, %c0_i32, %c0_i32_0 : i32, i32, i32
  }
}

</mosaic_0001>

<llo_original>
// kernel: tpu_custom_call.1
$region0: #{tpu_custom_call.1}
  #allocation0 [shape = 'u32[]', space=smem, size = 0x4, offset = 0x4, fixed_abs, tag = 'smem constant byte address 0x4 - core index']
  #allocation1 [shape = 'u32[144,128]{1,0:T(1,128)}', space=vmem, size = 0x12000, scoped, tag = 'internal scratch']
  %s0 = inlined_call_operand.vmem [shape: f32[2,8,64], index: 0, kind: input, shape index: {}]
  %s1 = inlined_call_operand.vmem [shape: f32[2,8,32], index: 1, kind: input, shape index: {}]
  %s2 = inlined_call_operand.vmem [shape: f32[64,32], index: 2, kind: input, shape index: {}]
  %s3 = inlined_call_operand.vmem [shape: f32[32,8], index: 3, kind: input, shape index: {}]
  %s4 = inlined_call_operand.vmem [shape: f32[1,32], index: 4, kind: input, shape index: {}]
  %s5 = inlined_call_operand.hbm [shape: f32[2,8,32], index: 5, kind: output, shape index: {}]
  %s6 = sld [smem:[#allocation0]]
  $region30: #{tpu_custom_call.1} parent=0
    _
  %s8 = ssub.s32 1, %s6
  %s9 = scalar_select 0, %s8, %s6
  $region1: #{tpu_custom_call.1} parent=0
    #allocation2 [shape = 'u8[8192]{0}', space=vmem, size = 0x2000, scoped, tag = 'output window, operand 0, single buffered']
    #allocation3 [shape = 's32[1]{0}', space=sflag, size = 0x4, scoped, tag = 'scoped memory for tpu_custom_call.1']
    %10 = vsyncpa [#allocation3], 0
    // Predicated region
    $region2: #{tpu_custom_call.1} parent=1 // pred_check
      _
    $region3: #{tpu_custom_call.1} parent=1 // pred_check_branch
      %12 = sbr.rel (0) target = $region5
    $region4: #{tpu_custom_call.1} parent=1 // pred_region
      _
    $region5: #{tpu_custom_call.1} parent=1 // pred_fallthru
      _
    // Predicated region
    $region6: #{tpu_custom_call.1} parent=1 // pred_check
      _
    $region7: #{tpu_custom_call.1} parent=1 // pred_check_branch
      %14 = sbr.rel (0) target = $region9
    $region8: #{tpu_custom_call.1} parent=1 // pred_region
      _
    $region9: #{tpu_custom_call.1} parent=1 // pred_fallthru
      _
    // Predicated region
    $region10: #{tpu_custom_call.1} parent=1 // pred_check
      _
    $region11: #{tpu_custom_call.1} parent=1 // pred_check_branch
      %16 = sbr.rel (0) target = $region13
    $region12: #{tpu_custom_call.1} parent=1 // pred_region
      _
    $region13: #{tpu_custom_call.1} parent=1 // pred_fallthru
      _
    // Predicated region
    $region14: #{tpu_custom_call.1} parent=1 // pred_check
      _
    $region15: #{tpu_custom_call.1} parent=1 // pred_check_branch
      %18 = sbr.rel (0) target = $region17
    $region16: #{tpu_custom_call.1} parent=1 // pred_region
      _
    $region17: #{tpu_custom_call.1} parent=1 // pred_fallthru
      _
    // Predicated region
    $region18: #{tpu_custom_call.1} parent=1 // pred_check
      _
    $region19: #{tpu_custom_call.1} parent=1 // pred_check_branch
      %20 = sbr.rel (0) target = $region21
    $region20: #{tpu_custom_call.1} parent=1 // pred_region
      _
    $region21: #{tpu_custom_call.1} parent=1 // pred_fallthru
      _
    %v21 = vld [vmem:[%s0] sm:$0xff]
    %v22 = vld [vmem:[%s0 + $0x8] sm:$0xff]
    %v23 = vld [vmem:[%s2] sm:$0xff]
    %v24 = vld [vmem:[%s2 + $0x8] sm:$0xff]
    %v25 = vld [vmem:[%s2 + $0x10] sm:$0xff]
    %v26 = vld [vmem:[%s2 + $0x18] sm:$0xff]
    %v27 = vld [vmem:[%s2 + $0x20] sm:$0xff]
    %v28 = vld [vmem:[%s2 + $0x28] sm:$0xff]
    %v29 = vld [vmem:[%s2 + $0x30] sm:$0xff]
    %v30 = vld [vmem:[%s2 + $0x38] sm:$0xff]
    %v31 = vld [vmem:[%s4] sm:$0x1]
    %v33 = vlaneseq
    %v34 = vshrl.u32 %v33, 7
    %v35 = vsub.s32 0, %v34
    %v36 = vrot.slane %v31, %v35
    %vm38 = vcmask 523264
    %v40 = vsel %vm38, %v21, 0
    %v43 = vsel %vm38, %v22, 0
    %45 = vmatprep.subr.mxu0 0.0
    %46 = vmatpush1.msra.mxu0 %v23
    %47 = vmatprep.subr.mxu0 0.0
    %48 = vmatpush1.msra.mxu0 %v24
    %49 = vmatprep.subr.mxu0 0.0
    %50 = vmatpush1.msra.mxu0 %v25
    %51 = vmatprep.subr.mxu0 0.0
    %52 = vmatpush1.msra.mxu0 %v26
    %53 = vmatprep.subr.mxu0 0.0
    %54 = vmatpush1.msra.mxu0 %v27
    %55 = vmatprep.subr.mxu0 0.0
    %56 = vmatpush1.msra.mxu0 %v28
    %57 = vmatprep.subr.mxu0 0.0
    %58 = vmatpush1.msra.mxu0 %v29
    %59 = vmatprep.subr.mxu0 0.0
    %60 = vmatpush1.msra.mxu0 %v30
    %61 = vmatprep.subr.mxu0 0.0
    %62 = vmatpush1.msra.mxu0 0.0
    %63 = vmatprep.subr.mxu0 0.0
    %64 = vmatpush1.msra.mxu0 0.0
    %65 = vmatprep.subr.mxu0 0.0
    %66 = vmatpush1.msra.mxu0 0.0
    %67 = vmatprep.subr.mxu0 0.0
    %68 = vmatpush1.msra.mxu0 0.0
    %69 = vmatprep.subr.mxu0 0.0
    %70 = vmatpush1.msra.mxu0 0.0
    %71 = vmatprep.subr.mxu0 0.0
    %72 = vmatpush1.msra.mxu0 0.0
    %73 = vmatprep.subr.mxu0 0.0
    %74 = vmatpush1.msra.mxu0 0.0
    %75 = vmatprep.subr.mxu0 0.0
    %76 = vmatpush1.msra.mxu0 0.0
    %77 = vmatprep.subr.mxu0 0.0
    %78 = vmatpush1.msra.mxu0 0.0
    %79 = vmatprep.subr.mxu0 0.0
    %80 = vmatpush1.msra.mxu0 0.0
    %81 = vmatprep.subr.mxu0 0.0
    %82 = vmatpush1.msra.mxu0 0.0
    %83 = vmatprep.subr.mxu0 0.0
    %84 = vmatpush1.msra.mxu0 0.0
    %85 = vmatprep.subr.mxu0 0.0
    %86 = vmatpush1.msra.mxu0 0.0
    %87 = vmatprep.subr.mxu0 0.0
    %88 = vmatpush1.msra.mxu0 0.0
    %89 = vmatprep.subr.mxu0 0.0
    %90 = vmatpush1.msra.mxu0 0.0
    %91 = vmatprep.subr.mxu0 0.0
    %92 = vmatpush1.msra.mxu0 0.0
    %93 = vmatprep.subr.mxu0 0.0
    %94 = vmatpush1.msra.mxu0 0.0
    %95 = vmatprep.subr.mxu0 0.0
    %96 = vmatpush1.msra.mxu0 0.0
    %97 = vmatprep.subr.mxu0 0.0
    %98 = vmatpush1.msra.mxu0 0.0
    %99 = vmatprep.subr.mxu0 0.0
    %100 = vmatpush1.msra.mxu0 0.0
    %101 = vmatprep.subr.mxu0 0.0
    %102 = vmatpush1.msra.mxu0 0.0
    %103 = vmatprep.subr.mxu0 0.0
    %104 = vmatpush1.msra.mxu0 0.0
    %105 = vmatprep.subr.mxu0 0.0
    %106 = vmatpush1.msra.mxu0 0.0
    %107 = vmatprep.subr.mxu0 0.0
    %108 = vmatpush1.msra.mxu0 0.0
    %109 = vmatprep.mubr.f32.mxu0 0.0
    %110 = vmatmul.mubr.f32.gmra.mrb[0].mxu0 %v40
    %v111 = vpop.f32.mrb[0].mxu0
    %v112 = vadd.f32 %v36, %v111
    %v113 = vpop.f32.mrb[0].mxu0
    %114 = vmatprep.mubr.f32.mxu0 0.0
    %115 = vmatmul.mubr.f32.gmra.mrb[0].mxu0 %v43
    %v116 = vpop.f32.mrb[0].mxu0
    %v117 = vadd.f32 %v36, %v116
    %v118 = vpop.f32.mrb[0].mxu0
    %119 = vdwg.mxu0
    %v120 = vmax.f32 %v112, 0.0
    %v121 = vmax.f32 %v117, 0.0
    %v122 = vld [vmem:[%s3] sm:$0xff]
    %v123 = vld [vmem:[%s3 + $0x8] sm:$0xff]
    %v124 = vld [vmem:[%s3 + $0x10] sm:$0xff]
    %v125 = vld [vmem:[%s3 + $0x18] sm:$0xff]
    %vm126 = vcmask 261120
    %v128 = vsel %vm126, %v120, 0
    %v131 = vsel %vm126, %v121, 0
    %133 = vmatprep.subr.mxu0 0.0
    %134 = vmatpush1.msra.mxu0 %v122
    %135 = vmatprep.subr.mxu0 0.0
    %136 = vmatpush1.msra.mxu0 %v123
    %137 = vmatprep.subr.mxu0 0.0
    %138 = vmatpush1.msra.mxu0 %v124
    %139 = vmatprep.subr.mxu0 0.0
    %140 = vmatpush1.msra.mxu0 %v125
    %141 = vmatprep.subr.mxu0 0.0
    %142 = vmatpush1.msra.mxu0 0.0
    %143 = vmatprep.subr.mxu0 0.0
    %144 = vmatpush1.msra.mxu0 0.0
    %145 = vmatprep.subr.mxu0 0.0
    %146 = vmatpush1.msra.mxu0 0.0
    %147 = vmatprep.subr.mxu0 0.0
    %148 = vmatpush1.msra.mxu0 0.0
    %149 = vmatprep.subr.mxu0 0.0
    %150 = vmatpush1.msra.mxu0 0.0
    %151 = vmatprep.subr.mxu0 0.0
    %152 = vmatpush1.msra.mxu0 0.0
    %153 = vmatprep.subr.mxu0 0.0
    %154 = vmatpush1.msra.mxu0 0.0
    %155 = vmatprep.subr.mxu0 0.0
    %156 = vmatpush1.msra.mxu0 0.0
    %157 = vmatprep.subr.mxu0 0.0
    %158 = vmatpush1.msra.mxu0 0.0
    %159 = vmatprep.subr.mxu0 0.0
    %160 = vmatpush1.msra.mxu0 0.0
    %161 = vmatprep.subr.mxu0 0.0
    %162 = vmatpush1.msra.mxu0 0.0
    %163 = vmatprep.subr.mxu0 0.0
    %164 = vmatpush1.msra.mxu0 0.0
    %165 = vmatprep.subr.mxu0 0.0
    %166 = vmatpush1.msra.mxu0 0.0
    %167 = vmatprep.subr.mxu0 0.0
    %168 = vmatpush1.msra.mxu0 0.0
    %169 = vmatprep.subr.mxu0 0.0
    %170 = vmatpush1.msra.mxu0 0.0
    %171 = vmatprep.subr.mxu0 0.0
    %172 = vmatpush1.msra.mxu0 0.0
    %173 = vmatprep.subr.mxu0 0.0
    %174 = vmatpush1.msra.mxu0 0.0
    %175 = vmatprep.subr.mxu0 0.0
    %176 = vmatpush1.msra.mxu0 0.0
    %177 = vmatprep.subr.mxu0 0.0
    %178 = vmatpush1.msra.mxu0 0.0
    %179 = vmatprep.subr.mxu0 0.0
    %180 = vmatpush1.msra.mxu0 0.0
    %181 = vmatprep.subr.mxu0 0.0
    %182 = vmatpush1.msra.mxu0 0.0
    %183 = vmatprep.subr.mxu0 0.0
    %184 = vmatpush1.msra.mxu0 0.0
    %185 = vmatprep.subr.mxu0 0.0
    %186 = vmatpush1.msra.mxu0 0.0
    %187 = vmatprep.subr.mxu0 0.0
    %188 = vmatpush1.msra.mxu0 0.0
    %189 = vmatprep.subr.mxu0 0.0
    %190 = vmatpush1.msra.mxu0 0.0
    %191 = vmatprep.subr.mxu0 0.0
    %192 = vmatpush1.msra.mxu0 0.0
    %193 = vmatprep.subr.mxu0 0.0
    %194 = vmatpush1.msra.mxu0 0.0
    %195 = vmatprep.subr.mxu0 0.0
    %196 = vmatpush1.msra.mxu0 0.0
    %197 = vmatprep.mubr.f32.mxu0 0.0
    %198 = vmatmul.mubr.f32.gmra.mrb[0].mxu0 %v128
    %v199 = vpop.f32.mrb[0].mxu0
    %v200 = vadd.f32 0.0, %v199
    %v201 = vpop.f32.mrb[0].mxu0
    %202 = vmatprep.mubr.f32.mxu0 0.0
    %203 = vmatmul.mubr.f32.gmra.mrb[0].mxu0 %v131
    %v204 = vpop.f32.mrb[0].mxu0
    %v205 = vadd.f32 0.0, %v204
    %v206 = vpop.f32.mrb[0].mxu0
    %207 = vdwg.mxu0
    %vm208 = vcmask 64512
    %v209 = vsel %vm208, %v200, -inf
    %v210 = vrot.slane %v209, 4
    %v211 = vmax.f32 %v209, %v210
    %v212 = vrot.slane %v211, 2
    %v213 = vmax.f32 %v211, %v212
    %v214 = vrot.slane %v213, 1
    %v215 = vmax.f32 %v213, %v214
    %v216 = vsel %vm208, %v205, -inf
    %v217 = vrot.slane %v216, 4
    %v218 = vmax.f32 %v216, %v217
    %v219 = vrot.slane %v218, 2
    %v220 = vmax.f32 %v218, %v219
    %v221 = vrot.slane %v220, 1
    %v222 = vmax.f32 %v220, %v221
    %v223 = vsub.f32 %v200, %v215
    %v224 = vsub.f32 %v205, %v222
    %v225 = vmul.f32 %v223, 1.442695
    %v226 = vpow.pop %v225
    %v227 = vmul.f32 %v224, 1.442695
    %v228 = vpow.pop %v227
    %v229 = vsel %vm208, %v226, 0.0
    %v230 = vrot.slane %v229, 4
    %v231 = vadd.f32 %v229, %v230
    %v232 = vrot.slane %v231, 2
    %v233 = vadd.f32 %v231, %v232
    %v234 = vrot.slane %v233, 1
    %v235 = vadd.f32 %v233, %v234
    %v236 = vsel %vm208, %v228, 0.0
    %v237 = vrot.slane %v236, 4
    %v238 = vadd.f32 %v236, %v237
    %v239 = vrot.slane %v238, 2
    %v240 = vadd.f32 %v238, %v239
    %v241 = vrot.slane %v240, 1
    %v242 = vadd.f32 %v240, %v241
    %v243 = vrcp.pop %v235
    %v244 = vrcp.pop %v242
    %v245 = vmul.f32 %v226, %v243
    %v246 = vmul.f32 %v228, %v244
    %v247 = vld [vmem:[%s1] sm:$0xff]
    %v248 = vld [vmem:[%s1 + $0x8] sm:$0xff]
    %249 = vxpose.xlu0.b32.start [1/16] %v245, 128
    %250 = vxpose.xlu0.b32.cont [2/16] 0.0, 128
    %251 = vxpose.xlu0.b32.cont [3/16] 0.0, 128
    %252 = vxpose.xlu0.b32.cont [4/16] 0.0, 128
    %253 = vxpose.xlu0.b32.cont [5/16] 0.0, 128
    %254 = vxpose.xlu0.b32.cont [6/16] 0.0, 128
    %255 = vxpose.xlu0.b32.cont [7/16] 0.0, 128
    %256 = vxpose.xlu0.b32.cont [8/16] 0.0, 128
    %257 = vxpose.xlu0.b32.cont [9/16] 0.0, 128
    %258 = vxpose.xlu0.b32.cont [10/16] 0.0, 128
    %259 = vxpose.xlu0.b32.cont [11/16] 0.0, 128
    %260 = vxpose.xlu0.b32.cont [12/16] 0.0, 128
    %261 = vxpose.xlu0.b32.cont [13/16] 0.0, 128
    %262 = vxpose.xlu0.b32.cont [14/16] 0.0, 128
    %263 = vxpose.xlu0.b32.cont [15/16] 0.0, 128
    %264 = vxpose.xlu0.b32.end [16/16] 0.0, 128
    %v265 = vpop.trf.xlu0
    %v266 = vpop.trf.xlu0
    %v267 = vpop.trf.xlu0
    %v268 = vpop.trf.xlu0
    %v269 = vpop.trf.xlu0
    %v270 = vpop.trf.xlu0
    %v271 = vpop.trf.xlu0
    %v272 = vpop.trf.xlu0
    %v273 = vpop.trf.xlu0
    %v274 = vpop.trf.xlu0
    %v275 = vpop.trf.xlu0
    %v276 = vpop.trf.xlu0
    %v277 = vpop.trf.xlu0
    %v278 = vpop.trf.xlu0
    %v279 = vpop.trf.xlu0
    %v280 = vpop.trf.xlu0
    %v282 = vsel %vm208, %v265, 0
    %284 = vmatprep.subr.mxu0 0.0
    %285 = vmatpush1.msra.mxu0 %v247
    %286 = vmatprep.subr.mxu0 0.0
    %287 = vmatpush1.msra.mxu0 0.0
    %288 = vmatprep.subr.mxu0 0.0
    %289 = vmatpush1.msra.mxu0 0.0
    %290 = vmatprep.subr.mxu0 0.0
    %291 = vmatpush1.msra.mxu0 0.0
    %292 = vmatprep.subr.mxu0 0.0
    %293 = vmatpush1.msra.mxu0 0.0
    %294 = vmatprep.subr.mxu0 0.0
    %295 = vmatpush1.msra.mxu0 0.0
    %296 = vmatprep.subr.mxu0 0.0
    %297 = vmatpush1.msra.mxu0 0.0
    %298 = vmatprep.subr.mxu0 0.0
    %299 = vmatpush1.msra.mxu0 0.0
    %300 = vmatprep.subr.mxu0 0.0
    %301 = vmatpush1.msra.mxu0 0.0
    %302 = vmatprep.subr.mxu0 0.0
    %303 = vmatpush1.msra.mxu0 0.0
    %304 = vmatprep.subr.mxu0 0.0
    %305 = vmatpush1.msra.mxu0 0.0
    %306 = vmatprep.subr.mxu0 0.0
    %307 = vmatpush1.msra.mxu0 0.0
    %308 = vmatprep.subr.mxu0 0.0
    %309 = vmatpush1.msra.mxu0 0.0
    %310 = vmatprep.subr.mxu0 0.0
    %311 = vmatpush1.msra.mxu0 0.0
    %312 = vmatprep.subr.mxu0 0.0
    %313 = vmatpush1.msra.mxu0 0.0
    %314 = vmatprep.subr.mxu0 0.0
    %315 = vmatpush1.msra.mxu0 0.0
    %316 = vmatprep.subr.mxu0 0.0
    %317 = vmatpush1.msra.mxu0 0.0
    %318 = vmatprep.subr.mxu0 0.0
    %319 = vmatpush1.msra.mxu0 0.0
    %320 = vmatprep.subr.mxu0 0.0
    %321 = vmatpush1.msra.mxu0 0.0
    %322 = vmatprep.subr.mxu0 0.0
    %323 = vmatpush1.msra.mxu0 0.0
    %324 = vmatprep.subr.mxu0 0.0
    %325 = vmatpush1.msra.mxu0 0.0
    %326 = vmatprep.subr.mxu0 0.0
    %327 = vmatpush1.msra.mxu0 0.0
    %328 = vmatprep.subr.mxu0 0.0
    %329 = vmatpush1.msra.mxu0 0.0
    %330 = vmatprep.subr.mxu0 0.0
    %331 = vmatpush1.msra.mxu0 0.0
    %332 = vmatprep.subr.mxu0 0.0
    %333 = vmatpush1.msra.mxu0 0.0
    %334 = vmatprep.subr.mxu0 0.0
    %335 = vmatpush1.msra.mxu0 0.0
    %336 = vmatprep.subr.mxu0 0.0
    %337 = vmatpush1.msra.mxu0 0.0
    %338 = vmatprep.subr.mxu0 0.0
    %339 = vmatpush1.msra.mxu0 0.0
    %340 = vmatprep.subr.mxu0 0.0
    %341 = vmatpush1.msra.mxu0 0.0
    %342 = vmatprep.subr.mxu0 0.0
    %343 = vmatpush1.msra.mxu0 0.0
    %344 = vmatprep.subr.mxu0 0.0
    %345 = vmatpush1.msra.mxu0 0.0
    %346 = vmatprep.subr.mxu0 0.0
    %347 = vmatpush1.msra.mxu0 0.0
    %348 = vmatprep.mubr.f32.mxu0 0.0
    %349 = vmatmul.mubr.f32.gmra.mrb[0].mxu0 %v282
    %v350 = vpop.f32.mrb[0].mxu0
    %v351 = vadd.f32 0.0, %v350
    %v352 = vpop.f32.mrb[0].mxu0
    %353 = vdwg.mxu0
    %354 = vxpose.xlu0.b32.start [1/16] %v246, 128
    %355 = vxpose.xlu0.b32.cont [2/16] 0.0, 128
    %356 = vxpose.xlu0.b32.cont [3/16] 0.0, 128
    %357 = vxpose.xlu0.b32.cont [4/16] 0.0, 128
    %358 = vxpose.xlu0.b32.cont [5/16] 0.0, 128
    %359 = vxpose.xlu0.b32.cont [6/16] 0.0, 128
    %360 = vxpose.xlu0.b32.cont [7/16] 0.0, 128
    %361 = vxpose.xlu0.b32.cont [8/16] 0.0, 128
    %362 = vxpose.xlu0.b32.cont [9/16] 0.0, 128
    %363 = vxpose.xlu0.b32.cont [10/16] 0.0, 128
    %364 = vxpose.xlu0.b32.cont [11/16] 0.0, 128
    %365 = vxpose.xlu0.b32.cont [12/16] 0.0, 128
    %366 = vxpose.xlu0.b32.cont [13/16] 0.0, 128
    %367 = vxpose.xlu0.b32.cont [14/16] 0.0, 128
    %368 = vxpose.xlu0.b32.cont [15/16] 0.0, 128
    %369 = vxpose.xlu0.b32.end [16/16] 0.0, 128
    %v370 = vpop.trf.xlu0
    %v371 = vpop.trf.xlu0
    %v372 = vpop.trf.xlu0
    %v373 = vpop.trf.xlu0
    %v374 = vpop.trf.xlu0
    %v375 = vpop.trf.xlu0
    %v376 = vpop.trf.xlu0
    %v377 = vpop.trf.xlu0
    %v378 = vpop.trf.xlu0
    %v379 = vpop.trf.xlu0
    %v380 = vpop.trf.xlu0
    %v381 = vpop.trf.xlu0
    %v382 = vpop.trf.xlu0
    %v383 = vpop.trf.xlu0
    %v384 = vpop.trf.xlu0
    %v385 = vpop.trf.xlu0
    %v387 = vsel %vm208, %v370, 0
    %389 = vmatprep.subr.mxu0 0.0
    %390 = vmatpush1.msra.mxu0 %v248
    %391 = vmatprep.subr.mxu0 0.0
    %392 = vmatpush1.msra.mxu0 0.0
    %393 = vmatprep.subr.mxu0 0.0
    %394 = vmatpush1.msra.mxu0 0.0
    %395 = vmatprep.subr.mxu0 0.0
    %396 = vmatpush1.msra.mxu0 0.0
    %397 = vmatprep.subr.mxu0 0.0
    %398 = vmatpush1.msra.mxu0 0.0
    %399 = vmatprep.subr.mxu0 0.0
    %400 = vmatpush1.msra.mxu0 0.0
    %401 = vmatprep.subr.mxu0 0.0
    %402 = vmatpush1.msra.mxu0 0.0
    %403 = vmatprep.subr.mxu0 0.0
    %404 = vmatpush1.msra.mxu0 0.0
    %405 = vmatprep.subr.mxu0 0.0
    %406 = vmatpush1.msra.mxu0 0.0
    %407 = vmatprep.subr.mxu0 0.0
    %408 = vmatpush1.msra.mxu0 0.0
    %409 = vmatprep.subr.mxu0 0.0
    %410 = vmatpush1.msra.mxu0 0.0
    %411 = vmatprep.subr.mxu0 0.0
    %412 = vmatpush1.msra.mxu0 0.0
    %413 = vmatprep.subr.mxu0 0.0
    %414 = vmatpush1.msra.mxu0 0.0
    %415 = vmatprep.subr.mxu0 0.0
    %416 = vmatpush1.msra.mxu0 0.0
    %417 = vmatprep.subr.mxu0 0.0
    %418 = vmatpush1.msra.mxu0 0.0
    %419 = vmatprep.subr.mxu0 0.0
    %420 = vmatpush1.msra.mxu0 0.0
    %421 = vmatprep.subr.mxu0 0.0
    %422 = vmatpush1.msra.mxu0 0.0
    %423 = vmatprep.subr.mxu0 0.0
    %424 = vmatpush1.msra.mxu0 0.0
    %425 = vmatprep.subr.mxu0 0.0
    %426 = vmatpush1.msra.mxu0 0.0
    %427 = vmatprep.subr.mxu0 0.0
    %428 = vmatpush1.msra.mxu0 0.0
    %429 = vmatprep.subr.mxu0 0.0
    %430 = vmatpush1.msra.mxu0 0.0
    %431 = vmatprep.subr.mxu0 0.0
    %432 = vmatpush1.msra.mxu0 0.0
    %433 = vmatprep.subr.mxu0 0.0
    %434 = vmatpush1.msra.mxu0 0.0
    %435 = vmatprep.subr.mxu0 0.0
    %436 = vmatpush1.msra.mxu0 0.0
    %437 = vmatprep.subr.mxu0 0.0
    %438 = vmatpush1.msra.mxu0 0.0
    %439 = vmatprep.subr.mxu0 0.0
    %440 = vmatpush1.msra.mxu0 0.0
    %441 = vmatprep.subr.mxu0 0.0
    %442 = vmatpush1.msra.mxu0 0.0
    %443 = vmatprep.subr.mxu0 0.0
    %444 = vmatpush1.msra.mxu0 0.0
    %445 = vmatprep.subr.mxu0 0.0
    %446 = vmatpush1.msra.mxu0 0.0
    %447 = vmatprep.subr.mxu0 0.0
    %448 = vmatpush1.msra.mxu0 0.0
    %449 = vmatprep.subr.mxu0 0.0
    %450 = vmatpush1.msra.mxu0 0.0
    %451 = vmatprep.subr.mxu0 0.0
    %452 = vmatpush1.msra.mxu0 0.0
    %453 = vmatprep.mubr.f32.mxu0 0.0
    %454 = vmatmul.mubr.f32.gmra.mrb[0].mxu0 %v387
    %v455 = vpop.f32.mrb[0].mxu0
    %v456 = vadd.f32 0.0, %v455
    %v457 = vpop.f32.mrb[0].mxu0
    %458 = vdwg.mxu0
    %459 = vst.msk [vmem:[#allocation2] sm:$0xff] %vm126, %v351
    %460 = vst.msk [vmem:[#allocation2 + $0x8] sm:$0xff] %vm126, %v456
    // Predicated region
    $region22: #{tpu_custom_call.1} parent=1 // pred_check
      _
    $region23: #{tpu_custom_call.1} parent=1 // pred_check_branch
      %462 = sbr.rel (0) target = $region25
    $region24: #{tpu_custom_call.1} parent=1 // pred_region
      %s464 = ssub.s32 256, 256
      %465 = vsyncadd [#allocation3], %s464
      %s466 = sshll.u32 [#allocation2], 4
      %s467 = int_to_ptr.vmem [resolvable:$true] %s466
      %472 = dma.vmem_to_hbm [thread:$0]  %s467, 256, %s5, [#allocation3], 128, 128, 8
    $region25: #{tpu_custom_call.1} parent=1 // pred_fallthru
      _
    // Predicated region
    $region26: #{tpu_custom_call.1} parent=1 // pred_check
      _
    $region27: #{tpu_custom_call.1} parent=1 // pred_check_branch
      %474 = sbr.rel (0) target = $region29
    $region28: #{tpu_custom_call.1} parent=1 // pred_region
      %475 = dma.done [#allocation3], 256
    $region29: #{tpu_custom_call.1} parent=1 // pred_fallthru
      _
    %476 = vsyncpa [#allocation3], 1

</llo_original>
